<compile_context>
chip_gen: v7x
topology: tpu7x:2x2x1
jax: 0.10.0
libtpu: 0.0.40
codegen_flags: <defaults>
</compile_context>

<pallas_src>
import functools
import math

import jax
import jax.numpy as jnp
from jax.experimental import pallas as pl
from jax.experimental.pallas import tpu as pltpu

NUM_SAMPLE = 4
DROPOUT_P = 0.5


# ---------------------------------------------------------------------------
# Pass 1: dropout keep-count pre-pass (element-wise, VALU only).
#   x_eff[e] = x[e] * keep_count[e] * (1 / (keep_prob * N))
# keep_count[e] = number of the N Bernoulli(keep=1-p) samples that kept e.
# ---------------------------------------------------------------------------
def _dropout_count_kernel(seed_ref, x_ref, xe_ref, *, num_sample, thr_byte,
                          scale, in_ch, no_dropout):
    # seed_ref : SMEM (1,) int32
    # x_ref    : VMEM (tm, tk) input tile
    # xe_ref   : VMEM (tm, tk) output tile (matmul dtype, typically bf16)
    x = x_ref[...].astype(jnp.float32)

    if no_dropout:
        # p == 0: every sample keeps everything -> x_eff == x exactly.
        xe_ref[...] = (x * jnp.float32(num_sample * scale)).astype(xe_ref.dtype)
        return

    tm, tk = x_ref.shape
    i_idx = pl.program_id(0)
    k_idx = pl.program_id(1)

    # Global element index of each x element; depends only on (batch tile,
    # k tile), never on the out_ch tile (the matmul pass never re-derives it).
    # TODO(synk): uint32 linear index wraps when B*in_ch >= 2^32; use a
    # row-salted / 64-bit index for very large activations.
    row = jax.lax.broadcasted_iota(jnp.int32, (tm, tk), 0) + i_idx * tm
    col = jax.lax.broadcasted_iota(jnp.int32, (tm, tk), 1) + k_idx * tk
    lin = row.astype(jnp.uint32) * jnp.uint32(in_ch) + col.astype(jnp.uint32)

    seed_u = seed_ref[0].astype(jnp.uint32) * jnp.uint32(0x9E3779B1)
    thr = jnp.uint32(thr_byte)

    # One fmix32 hash supplies up to 4 Bernoulli decisions (8-bit fields).
    keep_count = jnp.zeros((tm, tk), jnp.int32)
    num_hashes = -(-num_sample // 4)           # ceil(num_sample / 4)
    for hidx in range(num_hashes):             # tiny, static, unrolled
        salt = ((hidx + 1) * 0x7FEB352D) & 0xFFFFFFFF
        h = lin ^ seed_u ^ jnp.uint32(salt)
        # murmur3 fmix32 avalanche (pure integer VPU ops).
        h = h ^ (h >> 16)
        h = h * jnp.uint32(0x85EBCA6B)
        h = h ^ (h >> 13)
        h = h * jnp.uint32(0xC2B2AE35)
        h = h ^ (h >> 16)
        n_fields = min(4, num_sample - 4 * hidx)
        for f in range(n_fields):
            field = (h >> jnp.uint32(8 * f)) & jnp.uint32(0xFF)
            keep_count = keep_count + (field < thr).astype(jnp.int32)

    # Single int->f32 convert; dropout 1/keep_prob and 1/N averaging folded
    # here (exact in bf16 for p=0.5).
    xe_ref[...] = (x * (keep_count.astype(jnp.float32) * jnp.float32(scale))
                   ).astype(xe_ref.dtype)


# ---------------------------------------------------------------------------
# Pass 2: plain tiled matmul (MXU) + bias, K innermost with f32 accumulator.
# ---------------------------------------------------------------------------
def _matmul_bias_kernel(xe_ref, w_ref, b_ref, o_ref, acc_ref):
    # xe_ref : VMEM (tm, tk)  pre-masked activations (bf16)
    # w_ref  : VMEM (tk, tn)  pre-transposed weight tile (bf16)
    # b_ref  : VMEM (1, tn)   bias tile
    # o_ref  : VMEM (tm, tn)  output tile (resident across K)
    # acc_ref: VMEM (tm, tn)  f32 accumulator scratch
    k_idx = pl.program_id(2)

    @pl.when(k_idx == 0)
    def _init():
        acc_ref[...] = jnp.zeros_like(acc_ref)

    acc_ref[...] += jnp.dot(xe_ref[...], w_ref[...],
                            preferred_element_type=jnp.float32)

    @pl.when(k_idx == pl.num_programs(2) - 1)
    def _finalize():
        o_ref[...] = (acc_ref[...] + b_ref[...].astype(jnp.float32)
                      ).astype(o_ref.dtype)


def multi_sample_dropout_fc(x, w_t, bias, seed,
                            num_sample=NUM_SAMPLE, dropout=DROPOUT_P,
                            *, tm=256, tn=1024, tk=512,
                            matmul_dtype=jnp.bfloat16):
    """MultiSampleDropoutFC forward.

    x    : (B, in_ch)
    w_t  : (in_ch, out_ch)  -- nn.Linear weight, PRE-transposed.  In a real
                               deployment store it pre-cast to `matmul_dtype`
                               (bf16; fp8 is an option on v7x) at init time.
    bias : (out_ch,)
    seed : python int / int32 scalar (dropout RNG seed)
    Pass matmul_dtype=jnp.float32 if closer parity to the f32 reference is
    required (e.g. on v5e).
    """
    B, in_ch = x.shape
    in_ch_w, out_ch = w_t.shape
    assert in_ch == in_ch_w, "weight must be pre-transposed to (in_ch, out_ch)"

    # Clamp tiles to the problem and require even division (toy-shape
    # friendly; real deployments pick the largest (8,128)-aligned tiles that
    # fit the generation's scoped VMEM budget -- re-derive for v7x's 64 MiB).
    tm = min(tm, B)
    tn = min(tn, out_ch)
    tk = min(tk, in_ch)
    assert B % tm == 0 and out_ch % tn == 0 and in_ch % tk == 0, \
        "tile sizes must divide (B, out_ch, in_ch)"

    keep_prob = 1.0 - float(dropout)
    assert keep_prob > 0.0, "dropout must be < 1"
    no_dropout = dropout <= 0.0
    # 8-bit Bernoulli threshold (keep-prob resolution 1/256; exact for p=0.5;
    # clamp introduces a negligible ~2^-8 bias for keep_prob -> 1).
    thr_byte = min(int(round(keep_prob * 256.0)), 255)
    # Folded scaling: 1/keep_prob (dropout) * 1/N (averaging).
    scale = 1.0 / (keep_prob * num_sample)

    seed_arr = jnp.asarray([seed], dtype=jnp.int32)

    # Cast weight once, outside the kernels (parameter-storage concern).
    if w_t.dtype != matmul_dtype:
        w_t = w_t.astype(matmul_dtype)
    b2d = bias.reshape(1, out_ch)

    # ---- Pass 1: per-element keep-count, written once as matmul_dtype ----
    pre_kernel = functools.partial(
        _dropout_count_kernel,
        num_sample=int(num_sample),
        thr_byte=thr_byte,
        scale=scale,
        in_ch=int(in_ch),
        no_dropout=no_dropout,
    )
    x_eff = pl.pallas_call(
        pre_kernel,
        out_shape=jax.ShapeDtypeStruct((B, in_ch), matmul_dtype),
        grid=(B // tm, in_ch // tk),
        in_specs=[
            pl.BlockSpec(memory_space=pltpu.SMEM),            # seed
            pl.BlockSpec((tm, tk), lambda i, k: (i, k)),      # x
        ],
        out_specs=pl.BlockSpec((tm, tk), lambda i, k: (i, k)),
        compiler_params=pltpu.CompilerParams(
            dimension_semantics=("parallel", "parallel")),
    )(seed_arr, x)

    # ---- Pass 2: tiled matmul + bias ----
    grid = (B // tm, out_ch // tn, in_ch // tk)
    return pl.pallas_call(
        _matmul_bias_kernel,
        out_shape=jax.ShapeDtypeStruct((B, out_ch), x.dtype),
        grid=grid,
        in_specs=[
            pl.BlockSpec((tm, tk), lambda i, j, k: (i, k)),   # x_eff (bf16)
            pl.BlockSpec((tk, tn), lambda i, j, k: (k, j)),   # w^T   (bf16)
            pl.BlockSpec((1, tn), lambda i, j, k: (0, j)),    # bias
        ],
        out_specs=pl.BlockSpec((tm, tn), lambda i, j, k: (i, j)),
        scratch_shapes=[pltpu.VMEM((tm, tn), jnp.float32)],
        compiler_params=pltpu.CompilerParams(
            dimension_semantics=("parallel", "parallel", "arbitrary")),
    )(x_eff, w_t, b2d)


if __name__ == "__main__":
    # Small, TPU-friendly shapes; in_ch=256 with tk=128 exercises the K-tiled
    # accumulator path (matmul grid = (1, 1, 2), pre-pass grid = (1, 2)).
    B, IN_CH, OUT_CH = 8, 256, 128

    key = jax.random.PRNGKey(0)
    kx, kw, kb = jax.random.split(key, 3)

    x = jax.random.normal(kx, (B, IN_CH), dtype=jnp.float32)

    # Deterministic init mirroring nn.Linear's default (uniform +-1/sqrt(fan_in)).
    bound = 1.0 / math.sqrt(IN_CH)
    weight = jax.random.uniform(kw, (OUT_CH, IN_CH), jnp.float32, -bound, bound)
    bias = jax.random.uniform(kb, (OUT_CH,), jnp.float32, -bound, bound)

    # Pre-transpose ONCE (outside the hot path).
    w_t = jnp.transpose(weight)  # (IN_CH, OUT_CH)

    out = multi_sample_dropout_fc(x, w_t, bias, seed=0, tk=128)
    out = jax.block_until_ready(out)
    assert out.shape == (B, OUT_CH)
    assert bool(jnp.all(jnp.isfinite(out)))

    # Sanity check: with dropout=0 the module reduces to a plain Linear.
    out0 = multi_sample_dropout_fc(x, w_t, bias, seed=0, dropout=0.0, tk=128)
    out0 = jax.block_until_ready(out0)
    ref0 = x @ w_t + bias
    assert bool(jnp.allclose(out0, ref0, atol=5e-2, rtol=5e-2))  # bf16 MXU operands

    print("KERNEL_OK")
</pallas_src>

<mosaic_0001>
module attributes {stable_mosaic.version = 11 : i64} {
  func.func @_dropout_count_kernel(%arg0: i32, %arg1: i32, %arg2: memref<1xi32, #tpu.memory_space<smem>>, %arg3: memref<8x128xf32, #tpu.memory_space<vmem>>, %arg4: memref<8x128xbf16, #tpu.memory_space<vmem>>) attributes {dimension_semantics = [#tpu.dimension_semantics<parallel>, #tpu.dimension_semantics<parallel>], iteration_bounds = array<i64: 1, 2>, scalar_prefetch = 0 : i64, scratch_operands = 0 : i64, tpu.core_type = #tpu.core_type<tc>, window_params = [{transform_indices = @transform_0, window_bounds = array<i64: 1>}, {transform_indices = @transform_1, window_bounds = array<i64: 8, 128>}, {transform_indices = @transform_2, window_bounds = array<i64: 8, 128>}]} {
    %c0 = arith.constant 0 : index
    %c0_0 = arith.constant 0 : index
    %0 = vector.load %arg3[%c0, %c0_0] : memref<8x128xf32, #tpu.memory_space<vmem>>, vector<8x128xf32>
    %1 = tpu.iota {dimensions = array<i32: 0>} : vector<8x128xi32>
    %c8_i32 = arith.constant 8 : i32
    %2 = arith.muli %arg0, %c8_i32 : i32
    %3 = vector.broadcast %2 : i32 to vector<8x128xi32>
    %4 = arith.addi %1, %3 : vector<8x128xi32>
    %5 = tpu.iota {dimensions = array<i32: 1>} : vector<8x128xi32>
    %c128_i32 = arith.constant 128 : i32
    %6 = arith.muli %arg1, %c128_i32 : i32
    %7 = vector.broadcast %6 : i32 to vector<8x128xi32>
    %8 = arith.addi %5, %7 : vector<8x128xi32>
    %c256_i32 = arith.constant 256 : i32
    %9 = vector.broadcast %c256_i32 : i32 to vector<8x128xi32>
    %10 = arith.muli %4, %9 : vector<8x128xi32>
    %11 = arith.addi %10, %8 : vector<8x128xi32>
    %c0_1 = arith.constant 0 : index
    %12 = memref.load %arg2[%c0_1] : memref<1xi32, #tpu.memory_space<smem>>
    %c-1640531535_i32 = arith.constant -1640531535 : i32
    %13 = arith.muli %12, %c-1640531535_i32 : i32
    %c0_i32 = arith.constant 0 : i32
    %14 = vector.broadcast %c0_i32 : i32 to vector<8x128xi32>
    %15 = vector.broadcast %13 : i32 to vector<8x128xi32>
    %16 = arith.xori %11, %15 : vector<8x128xi32>
    %c2146121005_i32 = arith.constant 2146121005 : i32
    %17 = vector.broadcast %c2146121005_i32 : i32 to vector<8x128xi32>
    %18 = arith.xori %16, %17 : vector<8x128xi32>
    %c16_i32 = arith.constant 16 : i32
    %19 = vector.broadcast %c16_i32 : i32 to vector<8x128xi32>
    %20 = arith.shrui %18, %19 : vector<8x128xi32>
    %21 = arith.xori %18, %20 : vector<8x128xi32>
    %c-2048144789_i32 = arith.constant -2048144789 : i32
    %22 = vector.broadcast %c-2048144789_i32 : i32 to vector<8x128xi32>
    %23 = arith.muli %21, %22 : vector<8x128xi32>
    %c13_i32 = arith.constant 13 : i32
    %24 = vector.broadcast %c13_i32 : i32 to vector<8x128xi32>
    %25 = arith.shrui %23, %24 : vector<8x128xi32>
    %26 = arith.xori %23, %25 : vector<8x128xi32>
    %c-1028477387_i32 = arith.constant -1028477387 : i32
    %27 = vector.broadcast %c-1028477387_i32 : i32 to vector<8x128xi32>
    %28 = arith.muli %26, %27 : vector<8x128xi32>
    %c16_i32_2 = arith.constant 16 : i32
    %29 = vector.broadcast %c16_i32_2 : i32 to vector<8x128xi32>
    %30 = arith.shrui %28, %29 : vector<8x128xi32>
    %31 = arith.xori %28, %30 : vector<8x128xi32>
    %c0_i32_3 = arith.constant 0 : i32
    %32 = vector.broadcast %c0_i32_3 : i32 to vector<8x128xi32>
    %33 = arith.shrui %31, %32 : vector<8x128xi32>
    %c255_i32 = arith.constant 255 : i32
    %34 = vector.broadcast %c255_i32 : i32 to vector<8x128xi32>
    %35 = arith.andi %33, %34 : vector<8x128xi32>
    %c128_i32_4 = arith.constant 128 : i32
    %36 = vector.broadcast %c128_i32_4 : i32 to vector<8x128xi32>
    %37 = arith.cmpi ult, %35, %36 : vector<8x128xi32>
    %38 = arith.extui %37 : vector<8x128xi1> to vector<8x128xi32>
    %39 = arith.addi %14, %38 : vector<8x128xi32>
    %c8_i32_5 = arith.constant 8 : i32
    %40 = vector.broadcast %c8_i32_5 : i32 to vector<8x128xi32>
    %41 = arith.shrui %31, %40 : vector<8x128xi32>
    %c255_i32_6 = arith.constant 255 : i32
    %42 = vector.broadcast %c255_i32_6 : i32 to vector<8x128xi32>
    %43 = arith.andi %41, %42 : vector<8x128xi32>
    %c128_i32_7 = arith.constant 128 : i32
    %44 = vector.broadcast %c128_i32_7 : i32 to vector<8x128xi32>
    %45 = arith.cmpi ult, %43, %44 : vector<8x128xi32>
    %46 = arith.extui %45 : vector<8x128xi1> to vector<8x128xi32>
    %47 = arith.addi %39, %46 : vector<8x128xi32>
    %c16_i32_8 = arith.constant 16 : i32
    %48 = vector.broadcast %c16_i32_8 : i32 to vector<8x128xi32>
    %49 = arith.shrui %31, %48 : vector<8x128xi32>
    %c255_i32_9 = arith.constant 255 : i32
    %50 = vector.broadcast %c255_i32_9 : i32 to vector<8x128xi32>
    %51 = arith.andi %49, %50 : vector<8x128xi32>
    %c128_i32_10 = arith.constant 128 : i32
    %52 = vector.broadcast %c128_i32_10 : i32 to vector<8x128xi32>
    %53 = arith.cmpi ult, %51, %52 : vector<8x128xi32>
    %54 = arith.extui %53 : vector<8x128xi1> to vector<8x128xi32>
    %55 = arith.addi %47, %54 : vector<8x128xi32>
    %c24_i32 = arith.constant 24 : i32
    %56 = vector.broadcast %c24_i32 : i32 to vector<8x128xi32>
    %57 = arith.shrui %31, %56 : vector<8x128xi32>
    %c255_i32_11 = arith.constant 255 : i32
    %58 = vector.broadcast %c255_i32_11 : i32 to vector<8x128xi32>
    %59 = arith.andi %57, %58 : vector<8x128xi32>
    %c128_i32_12 = arith.constant 128 : i32
    %60 = vector.broadcast %c128_i32_12 : i32 to vector<8x128xi32>
    %61 = arith.cmpi ult, %59, %60 : vector<8x128xi32>
    %62 = arith.extui %61 : vector<8x128xi1> to vector<8x128xi32>
    %63 = arith.addi %55, %62 : vector<8x128xi32>
    %64 = arith.sitofp %63 : vector<8x128xi32> to vector<8x128xf32>
    %cst = arith.constant 5.000000e-01 : f32
    %65 = vector.broadcast %cst : f32 to vector<8x128xf32>
    %66 = arith.mulf %64, %65 : vector<8x128xf32>
    %67 = arith.mulf %0, %66 : vector<8x128xf32>
    %68 = arith.truncf %67 : vector<8x128xf32> to vector<8x128xbf16>
    %c0_13 = arith.constant 0 : index
    %c0_14 = arith.constant 0 : index
    %69 = vector.load %arg4[%c0_13, %c0_14] : memref<8x128xbf16, #tpu.memory_space<vmem>>, vector<8x128xbf16>
    tpu.vector_store %arg4[%c0_13, %c0_14], %68 {strides = array<i32>} : memref<8x128xbf16, #tpu.memory_space<vmem>>, vector<8x128xbf16>,
    return
  }
  func.func @transform_0(%arg0: i32, %arg1: i32) -> i32 {
    %c0_i32 = arith.constant 0 : i32
    %c0_i32_0 = arith.constant 0 : i32
    return %c0_i32 : i32
  }
  func.func @transform_1(%arg0: i32, %arg1: i32) -> (i32, i32) {
    %c0_i32 = arith.constant 0 : i32
    return %arg0, %arg1 : i32, i32
  }
  func.func @transform_2(%arg0: i32, %arg1: i32) -> (i32, i32) {
    %c0_i32 = arith.constant 0 : i32
    return %arg0, %arg1 : i32, i32
  }
}

</mosaic_0001>

<llo_original>
// kernel: tpu_custom_call.1
$region0: #{tpu_custom_call.1}
  #allocation0 [shape = 'u32[]', space=smem, size = 0x4, offset = 0x4, fixed_abs, tag = 'smem constant byte address 0x4 - core index']
  #allocation1 [shape = 'u32[144,128]{1,0:T(1,128)}', space=vmem, size = 0x12000, scoped, tag = 'internal scratch']
  #allocation2 [shape = 's32[1]{0:T(128)S(6)}', space=smem, size = 0x200, scoped, tag = 'scoped memory for tpu_custom_call.1']
  %s0 = inlined_call_operand.<no memory space> [shape: s32[1], index: 0, kind: input, shape index: {}]
  %s1 = inlined_call_operand.hbm [shape: f32[8,256], index: 1, kind: input, shape index: {}]
  %s2 = inlined_call_operand.hbm [shape: bf16[8,256], index: 2, kind: output, shape index: {}]
  %s3 = sld [smem:[#allocation0]]
  $region45: #{tpu_custom_call.1} parent=0
    _
  %s5 = ssub.s32 1, %s3
  %s6 = scalar_select 0, %s5, %s3
  %7 = sst [smem:[#allocation2]] %s0
  $region1: #{tpu_custom_call.1} parent=0
    #allocation3 [shape = 'u8[8192]{0}', space=vmem, size = 0x2000, scoped, tag = 'input window, operand 1']
    #allocation4 [shape = 's32[2]{0}', space=sflag, size = 0x8, scoped, tag = 'scoped memory for tpu_custom_call.1']
    #allocation5 [shape = 's32[2]{0}', space=sflag, size = 0x8, scoped, tag = 'scoped memory for tpu_custom_call.1']
    #allocation6 [shape = 'u8[4096]{0}', space=vmem, size = 0x1000, scoped, tag = 'output window, operand 0']
    %8 = vsyncpa [#allocation4], 0
    %s9 = scalar_lea.sflag [#allocation4], 1
    %10 = vsyncpa %s9, 0
    %11 = vsyncpa [#allocation5], 0
    %s12 = scalar_lea.sflag [#allocation5], 1
    %13 = vsyncpa %s12, 0
    loop: start=0, step=1, limit=4
    $region2: #{tpu_custom_call.1} parent=1 // loop_pre_header
      _
    $region3: #{tpu_custom_call.1} parent=1 // loop_header
      %s15 = sphi 0, %s19
      %p16 = scmp.ge.s32.totalorder %s15, 4
      %s22 = sphi 0, %s34
      %s23 = sphi 0, %s30
      %s24 = sphi 0, %s22
      %s25 = sphi 0, %s23
      %s26 = sphi 0, %s24
      %s27 = sphi 0, %s25
      %s35 = sphi 0, %s35
      %s37 = sphi 0, %s35
      %s38 = sphi 0, %s37
      %s52 = sphi 0, %s38
      %s60 = sphi 0, %s62
      %s63 = sphi 0, %s60
      %s64 = sphi 0, %s63
      %s80 = sphi 0, %s64
      %s88 = sphi 0, %s90
      %s91 = sphi 0, %s88
      %s92 = sphi 0, %s91
      %s108 = sphi 0, %s92
    $region4: #{tpu_custom_call.1} parent=1 // loop_header_branch
      %18 = sbr.rel (%p16) target = $region8
    $region5: #{tpu_custom_call.1} parent=1 // loop_body
      %s20 = ssub.s32 %s15, 1
      %s21 = ssub.s32 %s15, 2
      %s28 = sadd.s32 1, %s23
      %p29 = scmp.ge.s32.totalorder %s28, 2
      %s30 = scalar_select %p29, 0, %s28
      %s31 = sadd.s32 1, %s22
      %s32 = scalar_select %p29, %s31, %s22
      %p33 = scmp.ge.s32.totalorder %s32, 1
      %s34 = scalar_select %p33, 0, %s32
      %s36 = sadd.s32 %s35, 1
      %p39 = scmp.eq.s32.totalorder %s15, 1
      %p40 = scmp.ne.s32.totalorder %s35, %s37
      %p41 = scmp.eq.s32.totalorder %s15, 0
      %p42 = por %p40, %p41
      %p43 = scmp.ne.s32.totalorder %s35, %s37
      %p44 = scmp.eq.s32.totalorder %s20, 1
      %p45 = por %p43, %p44
      %p46 = scmp.ne.s32.totalorder %s37, %s38
      %p47 = scmp.eq.s32.totalorder %s20, 0
      %p48 = por %p46, %p47
      %p49 = scmp.ne.s32.totalorder %s37, %s38
      %p50 = scmp.eq.s32.totalorder %s21, 1
      %p51 = por %p49, %p50
      %p53 = scmp.ne.s32.totalorder %s38, %s52
      %p54 = scmp.eq.s32.totalorder %s21, 0
      %p55 = por %p53, %p54
      %s56 = ssub.s32 %s22, %s34
      %s57 = ssub.s32 %s23, %s30
      %s58 = sor.u32 %s56, %s57
      %p59 = scmp.eq.s32.totalorder %s58, 0
      %s61 = sadd.s32 %s60, 1
      %s62 = scalar_select %p59, %s60, %s61
      %p65 = pneg %p59
      %p66 = scmp.eq.s32.totalorder %s15, 1
      %p67 = por %p65, %p66
      %p68 = scmp.ne.s32.totalorder %s60, %s63
      %p69 = scmp.eq.s32.totalorder %s15, 0
      %p70 = por %p68, %p69
      %p71 = scmp.ne.s32.totalorder %s60, %s63
      %p72 = scmp.eq.s32.totalorder %s20, 1
      %p73 = por %p71, %p72
      %p74 = scmp.ne.s32.totalorder %s63, %s64
      %p75 = scmp.eq.s32.totalorder %s20, 0
      %p76 = por %p74, %p75
      %p77 = scmp.ne.s32.totalorder %s63, %s64
      %p78 = scmp.eq.s32.totalorder %s21, 1
      %p79 = por %p77, %p78
      %p81 = scmp.ne.s32.totalorder %s64, %s80
      %p82 = scmp.eq.s32.totalorder %s21, 0
      %p83 = por %p81, %p82
      %s84 = ssub.s32 %s22, %s34
      %s85 = ssub.s32 %s23, %s30
      %s86 = sor.u32 %s84, %s85
      %p87 = scmp.eq.s32.totalorder %s86, 0
      %s89 = sadd.s32 %s88, 1
      %s90 = scalar_select %p87, %s88, %s89
      %p93 = pneg %p87
      %p94 = scmp.eq.s32.totalorder %s15, 1
      %p95 = por %p93, %p94
      %p96 = scmp.ne.s32.totalorder %s88, %s91
      %p97 = scmp.eq.s32.totalorder %s15, 0
      %p98 = por %p96, %p97
      %p99 = scmp.ne.s32.totalorder %s88, %s91
      %p100 = scmp.eq.s32.totalorder %s20, 1
      %p101 = por %p99, %p100
      %p102 = scmp.ne.s32.totalorder %s91, %s92
      %p103 = scmp.eq.s32.totalorder %s20, 0
      %p104 = por %p102, %p103
      %p105 = scmp.ne.s32.totalorder %s91, %s92
      %p106 = scmp.eq.s32.totalorder %s21, 1
      %p107 = por %p105, %p106
      %p109 = scmp.ne.s32.totalorder %s92, %s108
      %p110 = scmp.eq.s32.totalorder %s21, 0
      %p111 = por %p109, %p110
      %p112 = scmp.le.s32.totalorder 1, %s15
      %p113 = scmp.lt.s32.totalorder %s15, 3
      %p114 = pnand %p112, %p113
      %p115 = pneg %p114
      // Predicated region
      $region9: #{tpu_custom_call.1} parent=5 // pred_check
        _
      $region10: #{tpu_custom_call.1} parent=5 // pred_check_branch
        %117 = sbr.rel (%p114) target = $region12
      $region11: #{tpu_custom_call.1} parent=5 // pred_region
        %s118 = ssub.s32 %s15, 1
        // Predicated region
        $region13: #{tpu_custom_call.1} parent=11 // pred_check
          %p119 = pneg %p48
        $region14: #{tpu_custom_call.1} parent=11 // pred_check_branch
          %121 = sbr.rel (%p119) target = $region16
        $region15: #{tpu_custom_call.1} parent=11 // pred_region
          _
        $region16: #{tpu_custom_call.1} parent=11 // pred_fallthru
          _
      $region12: #{tpu_custom_call.1} parent=5 // pred_fallthru
        _
      %p122 = scmp.lt.s32.totalorder %s15, 2
      // Predicated region
      $region17: #{tpu_custom_call.1} parent=5 // pred_check
        %p123 = pneg %p122
      $region18: #{tpu_custom_call.1} parent=5 // pred_check_branch
        %125 = sbr.rel (%p123) target = $region20
      $region19: #{tpu_custom_call.1} parent=5 // pred_region
        // Predicated region
        $region21: #{tpu_custom_call.1} parent=19 // pred_check
          %p126 = pneg %p70
        $region22: #{tpu_custom_call.1} parent=19 // pred_check_branch
          %128 = sbr.rel (%p126) target = $region24
        $region23: #{tpu_custom_call.1} parent=19 // pred_region
          %s129 = sand.u32 %s60, 1
          %s130 = scalar_lea.sflag [#allocation4], %s129
          %s131 = sand.u32 %s60, 1
          %s132 = smul.addr %s131, 8
          %s133 = scalar_lea.vmem [#allocation3], %s132
          %s135 = ssub.s32 128, 128
          %136 = vsyncadd %s130, %s135
          %s137 = smul.addr %s22, 2
          %s138 = sadd.s32 %s23, %s137
          %s139 = smul.addr %s138, 128
          %s140 = scalar_lea.hbm %s1, %s139
          %s142 = sshll.u32 %s133, 4
          %s143 = int_to_ptr.vmem [resolvable:$true] %s142
          %145 = dma.hbm_to_vmem [thread:$0]  %s140, 128, %s143, %s130
        $region24: #{tpu_custom_call.1} parent=19 // pred_fallthru
          _
      $region20: #{tpu_custom_call.1} parent=5 // pred_fallthru
        _
      %p146 = scmp.le.s32.totalorder 1, %s15
      %p147 = scmp.lt.s32.totalorder %s15, 3
      %p148 = pnand %p146, %p147
      %p149 = pneg %p148
      // Predicated region
      $region25: #{tpu_custom_call.1} parent=5 // pred_check
        _
      $region26: #{tpu_custom_call.1} parent=5 // pred_check_branch
        %151 = sbr.rel (%p148) target = $region28
      $region27: #{tpu_custom_call.1} parent=5 // pred_region
        %s152 = ssub.s32 %s15, 1
        %s153 = sand.u32 %s63, 1
        %s154 = scalar_lea.sflag [#allocation4], %s153
        %s155 = sand.u32 %s63, 1
        %s156 = smul.addr %s155, 8
        %s157 = scalar_lea.vmem [#allocation3], %s156
        // Predicated region
        $region29: #{tpu_custom_call.1} parent=27 // pred_check
          %p158 = pneg %p76
        $region30: #{tpu_custom_call.1} parent=27 // pred_check_branch
          %160 = sbr.rel (%p158) target = $region32
        $region31: #{tpu_custom_call.1} parent=27 // pred_region
          %161 = dma.done %s154, 128
        $region32: #{tpu_custom_call.1} parent=27 // pred_fallthru
          _
        %p162 = pneg %p48
        %p163 = pneg %p45
        %s164 = sand.u32 %s63, 1
        %s165 = scalar_lea.sflag [#allocation4], %s164
        %s166 = sand.u32 %s63, 1
        %s167 = smul.addr %s166, 8
        %s168 = scalar_lea.vmem [#allocation3], %s167
        %p169 = pneg %p76
        %p170 = pneg %p73
        %p171 = pneg %p104
        %p172 = pneg %p101
        %s173 = sand.u32 %s91, 1
        %s174 = scalar_lea.sflag [#allocation5], %s173
        %s175 = sand.u32 %s91, 1
        %s176 = smul.addr %s175, 4
        %s177 = scalar_lea.vmem [#allocation6], %s176
        %v178 = vld [vmem:[%s157] sm:$0xff]
        %v179 = vlaneseq
        %v180 = vshrl.u32 %v179, 7
        %s181 = smul.u32 %s24, 8
        %v182 = vstv %s181
        %v183 = vadd.s32 %v180, %v182
        %v184 = vlaneseq
        %v185 = vand.u32 %v184, 127
        %s186 = smul.u32 %s25, 128
        %v187 = vstv %s186
        %v188 = vadd.s32 %v185, %v187
        %v189 = vmul.u32 %v183, 256
        %v190 = vadd.s32 %v189, %v188
        %s191 = sld [smem:[#allocation2]]
        %s192 = smul.u32 %s191, 2654435761
        %v193 = vstv %s192
        %v194 = vxor.u32 %v190, %v193
        %v195 = vxor.u32 %v194, 2146121005
        %v196 = vshrl.u32 %v195, 16
        %v197 = vxor.u32 %v195, %v196
        %v198 = vmul.u32 %v197, 2246822507
        %v199 = vshrl.u32 %v198, 13
        %v200 = vxor.u32 %v198, %v199
        %v201 = vmul.u32 %v200, 3266489909
        %v202 = vshrl.u32 %v201, 16
        %v203 = vxor.u32 %v201, %v202
        %v204 = vand.u32 %v203, 255
        %vm205 = vcmp.lt.u32.totalorder %v204, 128
        %v206 = vsel %vm205, 1, 0
        %v207 = vshrl.u32 %v203, 8
        %v208 = vand.u32 %v207, 255
        %vm209 = vcmp.lt.u32.totalorder %v208, 128
        %v210 = vsel %vm209, 1, 0
        %v211 = vadd.s32 %v206, %v210
        %v212 = vshrl.u32 %v203, 16
        %v213 = vand.u32 %v212, 255
        %vm214 = vcmp.lt.u32.totalorder %v213, 128
        %v215 = vsel %vm214, 1, 0
        %v216 = vadd.s32 %v211, %v215
        %v217 = vshrl.u32 %v203, 24
        %v218 = vand.u32 %v217, 255
        %vm219 = vcmp.lt.u32.totalorder %v218, 128
        %v220 = vsel %vm219, 1, 0
        %v221 = vadd.s32 %v216, %v220
        %v222 = vcvt.s32.f32 %v221
        %v223 = vmul.f32 %v222, 0.5
        %v224 = vmul.f32 %v178, %v223
        %v225 = vpack.c.bf16 %v224, %v224
        %226 = vst [vmem:[%s177] sm:$0xf] %v225
        %s227 = sand.u32 %s91, 1
        %s228 = scalar_lea.sflag [#allocation5], %s227
        %s229 = sand.u32 %s91, 1
        %s230 = smul.addr %s229, 4
        %s231 = scalar_lea.vmem [#allocation6], %s230
        // Predicated region
        $region33: #{tpu_custom_call.1} parent=27 // pred_check
          %p232 = pneg %p101
        $region34: #{tpu_custom_call.1} parent=27 // pred_check_branch
          %234 = sbr.rel (%p232) target = $region36
        $region35: #{tpu_custom_call.1} parent=27 // pred_region
          %s236 = ssub.s32 64, 64
          %237 = vsyncadd %s228, %s236
          %s238 = smul.addr %s24, 2
          %s239 = sadd.s32 %s25, %s238
          %s240 = smul.addr %s239, 64
          %s241 = scalar_lea.hbm %s2, %s240
          %s243 = sshll.u32 %s231, 4
          %s244 = int_to_ptr.vmem [resolvable:$true] %s243
          %246 = dma.vmem_to_hbm [thread:$0]  %s244, 64, %s241, %s228
        $region36: #{tpu_custom_call.1} parent=27 // pred_fallthru
          _
      $region28: #{tpu_custom_call.1} parent=5 // pred_fallthru
        _
      %p247 = scmp.le.s32.totalorder 2, %s15
      // Predicated region
      $region37: #{tpu_custom_call.1} parent=5 // pred_check
        %p248 = pneg %p247
      $region38: #{tpu_custom_call.1} parent=5 // pred_check_branch
        %250 = sbr.rel (%p248) target = $region40
      $region39: #{tpu_custom_call.1} parent=5 // pred_region
        %s251 = ssub.s32 %s15, 2
        // Predicated region
        $region41: #{tpu_custom_call.1} parent=39 // pred_check
          %p252 = pneg %p107
        $region42: #{tpu_custom_call.1} parent=39 // pred_check_branch
          %254 = sbr.rel (%p252) target = $region44
        $region43: #{tpu_custom_call.1} parent=39 // pred_region
          %s255 = sand.u32 %s92, 1
          %s256 = scalar_lea.sflag [#allocation5], %s255
          %s257 = sand.u32 %s92, 1
          %s258 = smul.addr %s257, 4
          %s259 = scalar_lea.vmem [#allocation6], %s258
          %260 = dma.done %s256, 64
        $region44: #{tpu_custom_call.1} parent=39 // pred_fallthru
          _
      $region40: #{tpu_custom_call.1} parent=5 // pred_fallthru
        _
    $region6: #{tpu_custom_call.1} parent=1 // loop_footer
      %s19 = sadd.s32 1, %s15
    $region7: #{tpu_custom_call.1} parent=1 // loop_footer_branch
      %14 = sbr.rel target = $region3
    $region8: #{tpu_custom_call.1} parent=1 // loop_exit
      _
    %261 = vsyncpa [#allocation4], 1
    %s262 = scalar_lea.sflag [#allocation4], 1
    %263 = vsyncpa %s262, 1
    %264 = vsyncpa [#allocation5], 1
    %s265 = scalar_lea.sflag [#allocation5], 1
    %266 = vsyncpa %s265, 1

</llo_original>
